<compile_context>
chip_gen: v7x
topology: tpu7x:2x2x1
jax: 0.10.0
libtpu: 0.0.40
codegen_flags: <defaults>
</compile_context>

<pallas_src>
import functools

import jax
import jax.numpy as jnp
from jax.experimental import pallas as pl
from jax.experimental.pallas import tpu as pltpu

EPS = 1e-5


def _basic_block_kernel(x_ref, w1_ref, w2_ref, gb_ref, out_ref, *, N, H, W, C, P):
    f32 = jnp.float32
    R = N * H
    WP = W * P

    x = x_ref[...]                                             # (R, W*C) lane-dense

    # Boundary-row masks for the H padding (zero the rows that would wrap).
    rows = jax.lax.broadcasted_iota(jnp.int32, (R, W * C), 0)
    top_mask = (rows % H != 0).astype(f32)                     # zero where h == 0
    bot_mask = (rows % H != H - 1).astype(f32)                 # zero where h == H-1

    def conv(z, w_ref):
        # di=0 operand: input row h-1 ; di=2 operand: input row h+1.
        up = pltpu.roll(z, 1, axis=0) * top_mask
        dn = pltpu.roll(z, R - 1, axis=0) * bot_mask           # roll by -1
        lhs = jnp.concatenate([up, z, dn], axis=1)             # (R, 3*W*C)
        return jnp.dot(lhs, w_ref[...], preferred_element_type=f32)

    def bn(acc, g_row, b_row):
        # One-pass stats: column sum and sum-of-squares together.
        s1 = jnp.sum(acc, axis=0, keepdims=True)               # (1, WP)
        s2 = jnp.sum(acc * acc, axis=0, keepdims=True)         # (1, WP)
        st = jnp.concatenate([s1, s2], axis=0)                 # (2, WP)
        # Roll-and-add butterfly over the W groups of P channels (XLU path).
        sh = P
        while sh < WP:
            st = st + pltpu.roll(st, sh, axis=1)
            sh *= 2
        st = st * (1.0 / (R * W))
        mu = st[0:1, :]                                        # per-channel mean (tiled)
        var = st[1:2, :] - mu * mu                             # biased var, E[x^2]-mu^2
        s = g_row * jax.lax.rsqrt(var + EPS)
        t = b_row - mu * s
        return acc * s + t                                     # single scale/shift pass

    # conv1 -> bn1 -> relu
    acc1 = conv(x, w1_ref)
    y1 = jnp.maximum(bn(acc1, gb_ref[0:1, :], gb_ref[1:2, :]), 0.0)

    # conv2 -> bn2 -> residual -> relu
    acc2 = conv(y1, w2_ref)
    y2 = bn(acc2, gb_ref[2:3, :], gb_ref[3:4, :])
    out_ref[...] = jnp.maximum(y2 + x, 0.0).astype(out_ref.dtype)


def _banded_conv_weights(w_oihw, W):
    """OIHW 3x3 weights -> one (3*W*Cin, W*Cout) banded matrix (no W padding).

    Wfull[(di*W + x)*Cin + c, w*Cout + p] = w[p, c, di, x - w + 1] when
    x - w + 1 in {0,1,2} (else 0), so
        out_row(h) = concat_di(masked input row h+di-1) @ Wfull
    computes the 3x3 / stride-1 / pad-1 convolution on unpadded 128-lane rows
    (the out-of-range column taps are simply absent from the band).
    """
    f32 = jnp.float32
    Cout, Cin = w_oihw.shape[0], w_oihw.shape[1]
    w_hwio = jnp.transpose(w_oihw, (2, 3, 1, 0)).astype(f32)      # (3,3,Cin,Cout)
    xs = jnp.arange(W)[:, None, None]                             # input col
    ws = jnp.arange(W)[None, :, None]                             # output col
    js = jnp.arange(3)[None, None, :]                             # kernel col tap
    band = (xs == ws + js - 1).astype(f32)                        # (W, W, 3)
    wb = jnp.einsum('xwj,ijcp->ixcwp', band, w_hwio)              # (3, W, Cin, W, Cout)
    return wb.reshape(3 * W * Cin, W * Cout)


def basic_block_forward(x_nhwc, w1_oihw, g1, b1, w2_oihw, g2, b2):
    """BasicBlock forward (stride=1, no downsample, BatchNorm2d train mode).

    x_nhwc: (N, H, W, C) channels-last; block boundary kept NHWC so no
    NCHW<->NHWC HBM transpose passes are needed around the kernel.
    """
    f32 = jnp.float32
    N, H, W, C = x_nhwc.shape
    P = w1_oihw.shape[0]
    assert C == P, "downsample=None / stride=1 requires inplanes == planes"
    assert (W & (W - 1)) == 0, "roll butterfly assumes W is a power of two"

    x2d = x_nhwc.astype(f32).reshape(N * H, W * C)    # lane-dense slab (free reshape)

    w1b = _banded_conv_weights(w1_oihw, W)            # (3*W*C, W*P)
    w2b = _banded_conv_weights(w2_oihw, W)            # (3*W*P, W*P)

    gb = jnp.stack([jnp.tile(g1.astype(f32), W),
                    jnp.tile(b1.astype(f32), W),
                    jnp.tile(g2.astype(f32), W),
                    jnp.tile(b2.astype(f32), W)], axis=0)   # (4, W*P)

    vmem = pl.BlockSpec(memory_space=pltpu.MemorySpace.VMEM)
    kernel = functools.partial(_basic_block_kernel, N=N, H=H, W=W, C=C, P=P)

    out2d = pl.pallas_call(
        kernel,
        out_shape=jax.ShapeDtypeStruct((N * H, W * P), f32),
        in_specs=[vmem] * 4,
        out_specs=vmem,
    )(x2d, w1b, w2b, gb)

    return out2d.reshape(N, H, W, P)


# ---------------- pure-JAX reference (for correctness check) ----------------
def _reference(x_nchw, w1, g1, b1, w2, g2, b2):
    def conv(z, w):
        return jax.lax.conv_general_dilated(
            z, w, window_strides=(1, 1), padding=((1, 1), (1, 1)),
            dimension_numbers=("NCHW", "OIHW", "NCHW"),
            precision=jax.lax.Precision.HIGHEST)

    def bn(y, g, b):
        mu = jnp.mean(y, axis=(0, 2, 3), keepdims=True)
        var = jnp.mean((y - mu) ** 2, axis=(0, 2, 3), keepdims=True)
        return ((y - mu) * jax.lax.rsqrt(var + EPS) * g.reshape(1, -1, 1, 1)
                + b.reshape(1, -1, 1, 1))

    out = jax.nn.relu(bn(conv(x_nchw, w1), g1, b1))
    out = bn(conv(out, w2), g2, b2)
    return jax.nn.relu(out + x_nchw)


if __name__ == "__main__":
    # TODO(synk): BatchNorm2d running-stats update (training-time side effect)
    # is not modeled; only the forward normalization with batch statistics is.
    key = jax.random.PRNGKey(0)
    N, C, H, W = 2, 8, 16, 16          # inplanes = planes = 8, stride = 1
    P = C
    ks = jax.random.split(key, 7)
    x_nhwc = jax.random.normal(ks[0], (N, H, W, C), jnp.float32)
    w1 = 0.1 * jax.random.normal(ks[1], (P, C, 3, 3), jnp.float32)   # OIHW
    w2 = 0.1 * jax.random.normal(ks[2], (P, P, 3, 3), jnp.float32)   # OIHW
    g1 = 1.0 + 0.1 * jax.random.normal(ks[3], (P,), jnp.float32)
    b1 = 0.1 * jax.random.normal(ks[4], (P,), jnp.float32)
    g2 = 1.0 + 0.1 * jax.random.normal(ks[5], (P,), jnp.float32)
    b2 = 0.1 * jax.random.normal(ks[6], (P,), jnp.float32)

    forward = jax.jit(basic_block_forward)
    out_nhwc = forward(x_nhwc, w1, g1, b1, w2, g2, b2)
    out_nhwc = jax.block_until_ready(out_nhwc)

    x_nchw = jnp.transpose(x_nhwc, (0, 3, 1, 2))
    ref_nchw = _reference(x_nchw, w1, g1, b1, w2, g2, b2)
    out_nchw = jnp.transpose(out_nhwc, (0, 3, 1, 2))
    assert out_nchw.shape == ref_nchw.shape == (N, P, H, W)
    err = float(jnp.max(jnp.abs(out_nchw - ref_nchw)))
    assert err < 2e-3, f"max abs err {err}"
    print("KERNEL_OK")
</pallas_src>

<mosaic_0001>
module attributes {stable_mosaic.version = 11 : i64} {
  func.func @_basic_block_kernel(%arg0: memref<32x128xf32, #tpu.memory_space<vmem>>, %arg1: memref<384x128xf32, #tpu.memory_space<vmem>>, %arg2: memref<384x128xf32, #tpu.memory_space<vmem>>, %arg3: memref<4x128xf32, #tpu.memory_space<vmem>>, %arg4: memref<32x128xf32, #tpu.memory_space<vmem>>) attributes {dimension_semantics = [], scalar_prefetch = 0 : i64, scratch_operands = 0 : i64, tpu.core_type = #tpu.core_type<tc>} {
    %c0 = arith.constant 0 : index
    %c0_0 = arith.constant 0 : index
    %0 = vector.load %arg0[%c0, %c0_0] : memref<32x128xf32, #tpu.memory_space<vmem>>, vector<32x128xf32>
    %1 = tpu.iota {dimensions = array<i32: 0>} : vector<32x128xi32>
    %c16_i32 = arith.constant 16 : i32
    %c0_i32 = arith.constant 0 : i32
    %2 = arith.cmpi eq, %c16_i32, %c0_i32 : i32
    %c1_i32 = arith.constant 1 : i32
    %3 = arith.select %2, %c1_i32, %c16_i32 : i32
    %4 = vector.broadcast %3 : i32 to vector<32x128xi32>
    %5 = arith.remsi %1, %4 : vector<32x128xi32>
    %c0_i32_1 = arith.constant 0 : i32
    %6 = vector.broadcast %c0_i32_1 : i32 to vector<32x128xi32>
    %7 = arith.cmpi ne, %5, %6 : vector<32x128xi32>
    %c0_i32_2 = arith.constant 0 : i32
    %8 = vector.broadcast %c0_i32_2 : i32 to vector<32x128xi32>
    %9 = arith.cmpi slt, %5, %8 : vector<32x128xi32>
    %c0_i32_3 = arith.constant 0 : i32
    %10 = arith.cmpi slt, %3, %c0_i32_3 : i32
    %11 = vector.broadcast %10 : i1 to vector<32x128xi1>
    %12 = vector.broadcast %11 : vector<32x128xi1> to vector<32x128xi1>
    %13 = arith.xori %9, %12 : vector<32x128xi1>
    %14 = arith.andi %13, %7 : vector<32x128xi1>
    %15 = vector.broadcast %3 : i32 to vector<32x128xi32>
    %16 = arith.addi %5, %15 : vector<32x128xi32>
    %17 = arith.select %14, %16, %5 : vector<32x128xi1>, vector<32x128xi32>
    %c0_i32_4 = arith.constant 0 : i32
    %18 = vector.broadcast %c0_i32_4 : i32 to vector<32x128xi32>
    %19 = arith.cmpi ne, %17, %18 : vector<32x128xi32>
    %20 = arith.extui %19 : vector<32x128xi1> to vector<32x128xi32>
    %21 = arith.sitofp %20 : vector<32x128xi32> to vector<32x128xf32>
    %c16_i32_5 = arith.constant 16 : i32
    %c0_i32_6 = arith.constant 0 : i32
    %22 = arith.cmpi eq, %c16_i32_5, %c0_i32_6 : i32
    %c1_i32_7 = arith.constant 1 : i32
    %23 = arith.select %22, %c1_i32_7, %c16_i32_5 : i32
    %24 = vector.broadcast %23 : i32 to vector<32x128xi32>
    %25 = arith.remsi %1, %24 : vector<32x128xi32>
    %c0_i32_8 = arith.constant 0 : i32
    %26 = vector.broadcast %c0_i32_8 : i32 to vector<32x128xi32>
    %27 = arith.cmpi ne, %25, %26 : vector<32x128xi32>
    %c0_i32_9 = arith.constant 0 : i32
    %28 = vector.broadcast %c0_i32_9 : i32 to vector<32x128xi32>
    %29 = arith.cmpi slt, %25, %28 : vector<32x128xi32>
    %c0_i32_10 = arith.constant 0 : i32
    %30 = arith.cmpi slt, %23, %c0_i32_10 : i32
    %31 = vector.broadcast %30 : i1 to vector<32x128xi1>
    %32 = vector.broadcast %31 : vector<32x128xi1> to vector<32x128xi1>
    %33 = arith.xori %29, %32 : vector<32x128xi1>
    %34 = arith.andi %33, %27 : vector<32x128xi1>
    %35 = vector.broadcast %23 : i32 to vector<32x128xi32>
    %36 = arith.addi %25, %35 : vector<32x128xi32>
    %37 = arith.select %34, %36, %25 : vector<32x128xi1>, vector<32x128xi32>
    %c15_i32 = arith.constant 15 : i32
    %38 = vector.broadcast %c15_i32 : i32 to vector<32x128xi32>
    %39 = arith.cmpi ne, %37, %38 : vector<32x128xi32>
    %40 = arith.extui %39 : vector<32x128xi1> to vector<32x128xi32>
    %41 = arith.sitofp %40 : vector<32x128xi32> to vector<32x128xf32>
    %c1_i32_11 = arith.constant 1 : i32
    %42 = tpu.dynamic_rotate %0 by %c1_i32_11 dim 0 : vector<32x128xf32>, i32 -> vector<32x128xf32>
    %43 = arith.mulf %42, %21 : vector<32x128xf32>
    %c31_i32 = arith.constant 31 : i32
    %44 = tpu.dynamic_rotate %0 by %c31_i32 dim 0 : vector<32x128xf32>, i32 -> vector<32x128xf32>
    %45 = arith.mulf %44, %41 : vector<32x128xf32>
    %46 = tpu.concatenate %43, %0, %45 in 1 : vector<32x128xf32>, vector<32x128xf32>, vector<32x128xf32> -> vector<32x384xf32>
    %c0_12 = arith.constant 0 : index
    %c0_13 = arith.constant 0 : index
    %47 = vector.load %arg1[%c0_12, %c0_13] : memref<384x128xf32, #tpu.memory_space<vmem>>, vector<384x128xf32>
    %cst = arith.constant dense<0.000000e+00> : vector<32x128xf32>
    %48 = tpu.matmul %46, %47, %cst {dimension_numbers = #tpu.dot_dimension_numbers<[1], [0], [0], [1], [0, 0, 1, 1], [], []>} : vector<32x384xf32>, vector<384x128xf32>, vector<32x128xf32> -> vector<32x128xf32>
    %c0_14 = arith.constant 0 : index
    %c0_15 = arith.constant 0 : index
    %49 = vector.load %arg3[%c0_14, %c0_15] : memref<4x128xf32, #tpu.memory_space<vmem>>, vector<1x128xf32>
    %c1 = arith.constant 1 : index
    %c0_16 = arith.constant 0 : index
    %50 = vector.load %arg3[%c1, %c0_16] : memref<4x128xf32, #tpu.memory_space<vmem>>, vector<1x128xf32>
    %cst_17 = arith.constant dense<0.000000e+00> : vector<128xf32>
    %51 = vector.multi_reduction <add>, %48, %cst_17 [0] : vector<32x128xf32> to vector<128xf32>
    %52 = vector.shape_cast %51 : vector<128xf32> to vector<1x128xf32>
    %53 = arith.mulf %48, %48 : vector<32x128xf32>
    %cst_18 = arith.constant dense<0.000000e+00> : vector<128xf32>
    %54 = vector.multi_reduction <add>, %53, %cst_18 [0] : vector<32x128xf32> to vector<128xf32>
    %55 = vector.shape_cast %54 : vector<128xf32> to vector<1x128xf32>
    %56 = tpu.concatenate %52, %55 in 0 : vector<1x128xf32>, vector<1x128xf32> -> vector<2x128xf32>
    %c8_i32 = arith.constant 8 : i32
    %57 = tpu.dynamic_rotate %56 by %c8_i32 dim 1 : vector<2x128xf32>, i32 -> vector<2x128xf32>
    %58 = arith.addf %56, %57 : vector<2x128xf32>
    %c16_i32_19 = arith.constant 16 : i32
    %59 = tpu.dynamic_rotate %58 by %c16_i32_19 dim 1 : vector<2x128xf32>, i32 -> vector<2x128xf32>
    %60 = arith.addf %58, %59 : vector<2x128xf32>
    %c32_i32 = arith.constant 32 : i32
    %61 = tpu.dynamic_rotate %60 by %c32_i32 dim 1 : vector<2x128xf32>, i32 -> vector<2x128xf32>
    %62 = arith.addf %60, %61 : vector<2x128xf32>
    %c64_i32 = arith.constant 64 : i32
    %63 = tpu.dynamic_rotate %62 by %c64_i32 dim 1 : vector<2x128xf32>, i32 -> vector<2x128xf32>
    %64 = arith.addf %62, %63 : vector<2x128xf32>
    %cst_20 = arith.constant 0.001953125 : f32
    %65 = vector.broadcast %cst_20 : f32 to vector<2x128xf32>
    %66 = arith.mulf %64, %65 : vector<2x128xf32>
    %67 = vector.extract_strided_slice %66 {offsets = [0, 0], sizes = [1, 128], strides = [1, 1]} : vector<2x128xf32> to vector<1x128xf32>
    %68 = vector.extract_strided_slice %66 {offsets = [1, 0], sizes = [1, 128], strides = [1, 1]} : vector<2x128xf32> to vector<1x128xf32>
    %69 = arith.mulf %67, %67 : vector<1x128xf32>
    %70 = arith.subf %68, %69 : vector<1x128xf32>
    %cst_21 = arith.constant 9.99999974E-6 : f32
    %71 = vector.broadcast %cst_21 : f32 to vector<1x128xf32>
    %72 = arith.addf %70, %71 : vector<1x128xf32>
    %73 = math.rsqrt %72 : vector<1x128xf32>
    %74 = arith.mulf %49, %73 : vector<1x128xf32>
    %75 = arith.mulf %67, %74 : vector<1x128xf32>
    %76 = arith.subf %50, %75 : vector<1x128xf32>
    %77 = vector.broadcast %74 : vector<1x128xf32> to vector<32x128xf32>
    %78 = arith.mulf %48, %77 : vector<32x128xf32>
    %79 = vector.broadcast %76 : vector<1x128xf32> to vector<32x128xf32>
    %80 = arith.addf %78, %79 : vector<32x128xf32>
    %cst_22 = arith.constant 0.000000e+00 : f32
    %81 = vector.broadcast %cst_22 : f32 to vector<32x128xf32>
    %82 = arith.maximumf %80, %81 : vector<32x128xf32>
    %c1_i32_23 = arith.constant 1 : i32
    %83 = tpu.dynamic_rotate %82 by %c1_i32_23 dim 0 : vector<32x128xf32>, i32 -> vector<32x128xf32>
    %84 = arith.mulf %83, %21 : vector<32x128xf32>
    %c31_i32_24 = arith.constant 31 : i32
    %85 = tpu.dynamic_rotate %82 by %c31_i32_24 dim 0 : vector<32x128xf32>, i32 -> vector<32x128xf32>
    %86 = arith.mulf %85, %41 : vector<32x128xf32>
    %87 = tpu.concatenate %84, %82, %86 in 1 : vector<32x128xf32>, vector<32x128xf32>, vector<32x128xf32> -> vector<32x384xf32>
    %c0_25 = arith.constant 0 : index
    %c0_26 = arith.constant 0 : index
    %88 = vector.load %arg2[%c0_25, %c0_26] : memref<384x128xf32, #tpu.memory_space<vmem>>, vector<384x128xf32>
    %cst_27 = arith.constant dense<0.000000e+00> : vector<32x128xf32>
    %89 = tpu.matmul %87, %88, %cst_27 {dimension_numbers = #tpu.dot_dimension_numbers<[1], [0], [0], [1], [0, 0, 1, 1], [], []>} : vector<32x384xf32>, vector<384x128xf32>, vector<32x128xf32> -> vector<32x128xf32>
    %c2 = arith.constant 2 : index
    %c0_28 = arith.constant 0 : index
    %90 = vector.load %arg3[%c2, %c0_28] : memref<4x128xf32, #tpu.memory_space<vmem>>, vector<1x128xf32>
    %c3 = arith.constant 3 : index
    %c0_29 = arith.constant 0 : index
    %91 = vector.load %arg3[%c3, %c0_29] : memref<4x128xf32, #tpu.memory_space<vmem>>, vector<1x128xf32>
    %cst_30 = arith.constant dense<0.000000e+00> : vector<128xf32>
    %92 = vector.multi_reduction <add>, %89, %cst_30 [0] : vector<32x128xf32> to vector<128xf32>
    %93 = vector.shape_cast %92 : vector<128xf32> to vector<1x128xf32>
    %94 = arith.mulf %89, %89 : vector<32x128xf32>
    %cst_31 = arith.constant dense<0.000000e+00> : vector<128xf32>
    %95 = vector.multi_reduction <add>, %94, %cst_31 [0] : vector<32x128xf32> to vector<128xf32>
    %96 = vector.shape_cast %95 : vector<128xf32> to vector<1x128xf32>
    %97 = tpu.concatenate %93, %96 in 0 : vector<1x128xf32>, vector<1x128xf32> -> vector<2x128xf32>
    %c8_i32_32 = arith.constant 8 : i32
    %98 = tpu.dynamic_rotate %97 by %c8_i32_32 dim 1 : vector<2x128xf32>, i32 -> vector<2x128xf32>
    %99 = arith.addf %97, %98 : vector<2x128xf32>
    %c16_i32_33 = arith.constant 16 : i32
    %100 = tpu.dynamic_rotate %99 by %c16_i32_33 dim 1 : vector<2x128xf32>, i32 -> vector<2x128xf32>
    %101 = arith.addf %99, %100 : vector<2x128xf32>
    %c32_i32_34 = arith.constant 32 : i32
    %102 = tpu.dynamic_rotate %101 by %c32_i32_34 dim 1 : vector<2x128xf32>, i32 -> vector<2x128xf32>
    %103 = arith.addf %101, %102 : vector<2x128xf32>
    %c64_i32_35 = arith.constant 64 : i32
    %104 = tpu.dynamic_rotate %103 by %c64_i32_35 dim 1 : vector<2x128xf32>, i32 -> vector<2x128xf32>
    %105 = arith.addf %103, %104 : vector<2x128xf32>
    %cst_36 = arith.constant 0.001953125 : f32
    %106 = vector.broadcast %cst_36 : f32 to vector<2x128xf32>
    %107 = arith.mulf %105, %106 : vector<2x128xf32>
    %108 = vector.extract_strided_slice %107 {offsets = [0, 0], sizes = [1, 128], strides = [1, 1]} : vector<2x128xf32> to vector<1x128xf32>
    %109 = vector.extract_strided_slice %107 {offsets = [1, 0], sizes = [1, 128], strides = [1, 1]} : vector<2x128xf32> to vector<1x128xf32>
    %110 = arith.mulf %108, %108 : vector<1x128xf32>
    %111 = arith.subf %109, %110 : vector<1x128xf32>
    %cst_37 = arith.constant 9.99999974E-6 : f32
    %112 = vector.broadcast %cst_37 : f32 to vector<1x128xf32>
    %113 = arith.addf %111, %112 : vector<1x128xf32>
    %114 = math.rsqrt %113 : vector<1x128xf32>
    %115 = arith.mulf %90, %114 : vector<1x128xf32>
    %116 = arith.mulf %108, %115 : vector<1x128xf32>
    %117 = arith.subf %91, %116 : vector<1x128xf32>
    %118 = vector.broadcast %115 : vector<1x128xf32> to vector<32x128xf32>
    %119 = arith.mulf %89, %118 : vector<32x128xf32>
    %120 = vector.broadcast %117 : vector<1x128xf32> to vector<32x128xf32>
    %121 = arith.addf %119, %120 : vector<32x128xf32>
    %122 = arith.addf %121, %0 : vector<32x128xf32>
    %cst_38 = arith.constant 0.000000e+00 : f32
    %123 = vector.broadcast %cst_38 : f32 to vector<32x128xf32>
    %124 = arith.maximumf %122, %123 : vector<32x128xf32>
    %c0_39 = arith.constant 0 : index
    %c0_40 = arith.constant 0 : index
    %125 = vector.load %arg4[%c0_39, %c0_40] : memref<32x128xf32, #tpu.memory_space<vmem>>, vector<32x128xf32>
    tpu.vector_store %arg4[%c0_39, %c0_40], %124 {strides = array<i32>} : memref<32x128xf32, #tpu.memory_space<vmem>>, vector<32x128xf32>,
    return
  }
}

</mosaic_0001>

<llo_original>
// kernel: tile.23
$region0: #{tile.23}
  #allocation0 [shape = 's32[1]{0}', space=sflag, size = 0x4, scoped, tag = 'scoped memory for tile.23']
  %s0 = inlined_call_operand.vmem [shape: f32[8], index: 0, kind: input, shape index: {}]
  %s1 = inlined_call_operand.vmem [shape: f32[16,8], index: 1, kind: output, shape index: {}]
  // Predicated region
  $region2: #{tile.23} parent=0 // pred_check
    _
  $region3: #{tile.23} parent=0 // pred_check_branch
    %3 = sbr.rel (0) target = $region5
  $region4: #{tile.23} parent=0 // pred_region
    _
  $region5: #{tile.23} parent=0 // pred_fallthru
    _
  %v4 = vld [vmem:[%s0] ss:$0 sm:$0xff]
  %5 = vst [vmem:[%s1] sm:$0xff] %v4
  %s6 = scalar_lea.vmem %s1, 8
  %7 = vst [vmem:[%s6] sm:$0xff] %v4

// kernel: tile.36
$region0: #{tile.36}
  %s0 = inlined_call_operand.vmem [shape: f32[16,8], index: 0, kind: input, shape index: {}]
  %s1 = inlined_call_operand.vmem [shape: f32[1,128], index: 1, kind: output, shape index: {}]
  $region1: #{tile.36} parent=0
    #allocation0 [shape = 'u8[4096]{0}', space=vmem, size = 0x1000, scoped, tag = 'scoped mem for output reshape']
    %v2 = vld [vmem:[%s0] sm:$0x1]
    %vm3 = vcmask 64512
    %4 = vst.msk [vmem:[#allocation0] sm:$0x1] %vm3, %v2
    %s5 = scalar_lea.vmem %s0, 15
    %v6 = vld [vmem:[%s5] sm:$0x1]
    %7 = vrot.lane.b32.xlu0 %v6, 120
    %v8 = vpop.permute.xlu0 %7
    %vm9 = vcmask 1048512
    %10 = vst.msk [vmem:[#allocation0] sm:$0x1] %vm9, %v8
    %s11 = scalar_lea.vmem %s0, 14
    %v12 = vld [vmem:[%s11] sm:$0x1]
    %13 = vrot.lane.b32.xlu0 %v12, 112
    %v14 = vpop.permute.xlu0 %13
    %vm15 = vcmask 982912
    %16 = vst.msk [vmem:[#allocation0] sm:$0x1] %vm15, %v14
    %s17 = scalar_lea.vmem %s0, 13
    %v18 = vld [vmem:[%s17] sm:$0x1]
    %19 = vrot.lane.b32.xlu0 %v18, 104
    %v20 = vpop.permute.xlu0 %19
    %vm21 = vcmask 917312
    %22 = vst.msk [vmem:[#allocation0] sm:$0x1] %vm21, %v20
    %s23 = scalar_lea.vmem %s0, 12
    %v24 = vld [vmem:[%s23] sm:$0x1]
    %25 = vrot.lane.b32.xlu0 %v24, 96
    %v26 = vpop.permute.xlu0 %25
    %vm27 = vcmask 851712
    %28 = vst.msk [vmem:[#allocation0] sm:$0x1] %vm27, %v26
    %s29 = scalar_lea.vmem %s0, 11
    %v30 = vld [vmem:[%s29] sm:$0x1]
    %31 = vrot.lane.b32.xlu0 %v30, 88
    %v32 = vpop.permute.xlu0 %31
    %vm33 = vcmask 786112
    %34 = vst.msk [vmem:[#allocation0] sm:$0x1] %vm33, %v32
    %s35 = scalar_lea.vmem %s0, 10
    %v36 = vld [vmem:[%s35] sm:$0x1]
    %37 = vrot.lane.b32.xlu0 %v36, 80
    %v38 = vpop.permute.xlu0 %37
    %vm39 = vcmask 720512
    %40 = vst.msk [vmem:[#allocation0] sm:$0x1] %vm39, %v38
    %s41 = scalar_lea.vmem %s0, 9
    %v42 = vld [vmem:[%s41] sm:$0x1]
    %43 = vrot.lane.b32.xlu0 %v42, 72
    %v44 = vpop.permute.xlu0 %43
    %vm45 = vcmask 654912
    %46 = vst.msk [vmem:[#allocation0] sm:$0x1] %vm45, %v44
    %s47 = scalar_lea.vmem %s0, 8
    %v48 = vld [vmem:[%s47] sm:$0x1]
    %49 = vrot.lane.b32.xlu0 %v48, 64
    %v50 = vpop.permute.xlu0 %49
    %vm51 = vcmask 589312
    %52 = vst.msk [vmem:[#allocation0] sm:$0x1] %vm51, %v50
    %s53 = scalar_lea.vmem %s0, 7
    %v54 = vld [vmem:[%s53] sm:$0x1]
    %55 = vrot.lane.b32.xlu0 %v54, 56
    %v56 = vpop.permute.xlu0 %55
    %vm57 = vcmask 523712
    %58 = vst.msk [vmem:[#allocation0] sm:$0x1] %vm57, %v56
    %s59 = scalar_lea.vmem %s0, 6
    %v60 = vld [vmem:[%s59] sm:$0x1]
    %61 = vrot.lane.b32.xlu0 %v60, 48
    %v62 = vpop.permute.xlu0 %61
    %vm63 = vcmask 458112
    %64 = vst.msk [vmem:[#allocation0] sm:$0x1] %vm63, %v62
    %s65 = scalar_lea.vmem %s0, 5
    %v66 = vld [vmem:[%s65] sm:$0x1]
    %67 = vrot.lane.b32.xlu0 %v66, 40
    %v68 = vpop.permute.xlu0 %67
    %vm69 = vcmask 392512
    %70 = vst.msk [vmem:[#allocation0] sm:$0x1] %vm69, %v68
    %s71 = scalar_lea.vmem %s0, 4
    %v72 = vld [vmem:[%s71] sm:$0x1]
    %73 = vrot.lane.b32.xlu0 %v72, 32
    %v74 = vpop.permute.xlu0 %73
    %vm75 = vcmask 326912
    %76 = vst.msk [vmem:[#allocation0] sm:$0x1] %vm75, %v74
    %s77 = scalar_lea.vmem %s0, 3
    %v78 = vld [vmem:[%s77] sm:$0x1]
    %79 = vrot.lane.b32.xlu0 %v78, 24
    %v80 = vpop.permute.xlu0 %79
    %vm81 = vcmask 261312
    %82 = vst.msk [vmem:[#allocation0] sm:$0x1] %vm81, %v80
    %s83 = scalar_lea.vmem %s0, 2
    %v84 = vld [vmem:[%s83] sm:$0x1]
    %85 = vrot.lane.b32.xlu0 %v84, 16
    %v86 = vpop.permute.xlu0 %85
    %vm87 = vcmask 195712
    %88 = vst.msk [vmem:[#allocation0] sm:$0x1] %vm87, %v86
    %s89 = scalar_lea.vmem %s0, 1
    %v90 = vld [vmem:[%s89] sm:$0x1]
    %91 = vrot.lane.b32.xlu0 %v90, 8
    %v92 = vpop.permute.xlu0 %91
    %vm93 = vcmask 130112
    %94 = vst.msk [vmem:[#allocation0] sm:$0x1] %vm93, %v92
    %s96 = sshllo.u32 0, 1
    %v98 = vld [vmem:[#allocation0] sm:%s96]
    %s99 = sshllo.u32 0, 1
    %100 = vst [vmem:[%s1] sm:%s99] %v98

// kernel: basic_block_forward.1
$region0: #{basic_block_forward.1}
  #allocation0 [shape = 'u32[]', space=smem, size = 0x4, offset = 0x4, fixed_abs, tag = 'smem constant byte address 0x4 - core index']
  #allocation1 [shape = 'u32[144,128]{1,0:T(1,128)}', space=vmem, size = 0x12000, scoped, tag = 'internal scratch']
  %s0 = inlined_call_operand.vmem [shape: f32[32,128], index: 0, kind: input, shape index: {}]
  %s1 = inlined_call_operand.vmem [shape: f32[384,128], index: 1, kind: input, shape index: {}]
  %s2 = inlined_call_operand.vmem [shape: f32[384,128], index: 2, kind: input, shape index: {}]
  %s3 = inlined_call_operand.vmem [shape: f32[4,128], index: 3, kind: input, shape index: {}]
  %s4 = inlined_call_operand.vmem [shape: f32[32,128], index: 4, kind: output, shape index: {}]
  %s5 = sld [smem:[#allocation0]]
  $region26: #{basic_block_forward.1} parent=0
    _
  %s7 = ssub.s32 1, %s5
  %s8 = scalar_select 0, %s7, %s5
  // Predicated region
  $region2: #{basic_block_forward.1} parent=0 // pred_check
    _
  $region3: #{basic_block_forward.1} parent=0 // pred_check_branch
    %10 = sbr.rel (0) target = $region5
  $region4: #{basic_block_forward.1} parent=0 // pred_region
    _
  $region5: #{basic_block_forward.1} parent=0 // pred_fallthru
    _
  // Predicated region
  $region6: #{basic_block_forward.1} parent=0 // pred_check
    _
  $region7: #{basic_block_forward.1} parent=0 // pred_check_branch
    %12 = sbr.rel (0) target = $region9
  $region8: #{basic_block_forward.1} parent=0 // pred_region
    _
  $region9: #{basic_block_forward.1} parent=0 // pred_fallthru
    _
  // Predicated region
  $region10: #{basic_block_forward.1} parent=0 // pred_check
    _
  $region11: #{basic_block_forward.1} parent=0 // pred_check_branch
    %14 = sbr.rel (0) target = $region13
  $region12: #{basic_block_forward.1} parent=0 // pred_region
    _
  $region13: #{basic_block_forward.1} parent=0 // pred_fallthru
    _
  // Predicated region
  $region14: #{basic_block_forward.1} parent=0 // pred_check
    _
  $region15: #{basic_block_forward.1} parent=0 // pred_check_branch
    %16 = sbr.rel (0) target = $region17
  $region16: #{basic_block_forward.1} parent=0 // pred_region
    _
  $region17: #{basic_block_forward.1} parent=0 // pred_fallthru
    _
  %v17 = vld [vmem:[%s0] sm:$0xff]
  %v18 = vld [vmem:[%s0 + $0x8] sm:$0xff]
  %v19 = vld [vmem:[%s0 + $0x10] sm:$0xff]
  %v20 = vld [vmem:[%s0 + $0x18] sm:$0xff]
  %v21 = vlaneseq
  %v22 = vshrl.u32 %v21, 7
  %v23 = vadd.s32 %v22, 8
  %v24 = vadd.s32 %v22, 16
  %v25 = vadd.s32 %v22, 24
  %vm26 = vcmp.lt.s32.totalorder %v22, 0
  %v27 = vsub.s32 0, %v22
  %v28 = vsel %vm26, %v27, %v22
  %v29 = vshrl.u32 %v28, 4
  %v30 = vand.u32 %v28, 15
  %v31 = vsub.s32 0, %v30
  %v32 = vsel %vm26, %v31, %v30
  %vm33 = vcmp.lt.s32.totalorder %v23, 0
  %v34 = vsub.s32 0, %v23
  %v35 = vsel %vm33, %v34, %v23
  %v36 = vshrl.u32 %v35, 4
  %v37 = vand.u32 %v35, 15
  %v38 = vsub.s32 0, %v37
  %v39 = vsel %vm33, %v38, %v37
  %vm40 = vcmp.lt.s32.totalorder %v24, 0
  %v41 = vsub.s32 0, %v24
  %v42 = vsel %vm40, %v41, %v24
  %v43 = vshrl.u32 %v42, 4
  %v44 = vand.u32 %v42, 15
  %v45 = vsub.s32 0, %v44
  %v46 = vsel %vm40, %v45, %v44
  %vm47 = vcmp.lt.s32.totalorder %v25, 0
  %v48 = vsub.s32 0, %v25
  %v49 = vsel %vm47, %v48, %v25
  %v50 = vshrl.u32 %v49, 4
  %v51 = vand.u32 %v49, 15
  %v52 = vsub.s32 0, %v51
  %v53 = vsel %vm47, %v52, %v51
  %vm54 = vcmp.ne.s32.totalorder %v32, 0
  %vm55 = vcmp.ne.s32.totalorder %v39, 0
  %vm56 = vcmp.ne.s32.totalorder %v46, 0
  %vm57 = vcmp.ne.s32.totalorder %v53, 0
  %vm58 = vcmp.lt.s32.totalorder %v32, 0
  %vm59 = vcmp.lt.s32.totalorder %v39, 0
  %vm60 = vcmp.lt.s32.totalorder %v46, 0
  %vm61 = vcmp.lt.s32.totalorder %v53, 0
  %vm62 = vmand %vm58, %vm54
  %vm63 = vmand %vm59, %vm55
  %vm64 = vmand %vm60, %vm56
  %vm65 = vmand %vm61, %vm57
  %v66 = vadd.s32 %v32, 16
  %v67 = vadd.s32 %v39, 16
  %v68 = vadd.s32 %v46, 16
  %v69 = vadd.s32 %v53, 16
  %v70 = vsel %vm62, %v66, %v32
  %v71 = vsel %vm63, %v67, %v39
  %v72 = vsel %vm64, %v68, %v46
  %v73 = vsel %vm65, %v69, %v53
  %vm74 = vcmp.ne.s32.totalorder %v70, 0
  %vm75 = vcmp.ne.s32.totalorder %v71, 0
  %vm76 = vcmp.ne.s32.totalorder %v72, 0
  %vm77 = vcmp.ne.s32.totalorder %v73, 0
  %v78 = vsel %vm74, 1, 0
  %v79 = vsel %vm75, 1, 0
  %v80 = vsel %vm76, 1, 0
  %v81 = vsel %vm77, 1, 0
  %v82 = vcvt.s32.f32 %v78
  %v83 = vcvt.s32.f32 %v79
  %v84 = vcvt.s32.f32 %v80
  %v85 = vcvt.s32.f32 %v81
  %vm86 = vcmp.ne.s32.totalorder %v70, 15
  %vm87 = vcmp.ne.s32.totalorder %v71, 15
  %vm88 = vcmp.ne.s32.totalorder %v72, 15
  %vm89 = vcmp.ne.s32.totalorder %v73, 15
  %v90 = vsel %vm86, 1, 0
  %v91 = vsel %vm87, 1, 0
  %v92 = vsel %vm88, 1, 0
  %v93 = vsel %vm89, 1, 0
  %v94 = vcvt.s32.f32 %v90
  %v95 = vcvt.s32.f32 %v91
  %v96 = vcvt.s32.f32 %v92
  %v97 = vcvt.s32.f32 %v93
  %v98 = vrot.slane %v17, 7
  %v99 = vrot.slane %v18, 7
  %v100 = vrot.slane %v19, 7
  %v101 = vrot.slane %v20, 7
  %vm102 = vcmp.lt.s32.totalorder %v22, 1
  %v103 = vsel %vm102, %v100, %v101
  %v104 = vsel %vm102, %v99, %v100
  %v105 = vsel %vm102, %v98, %v99
  %v106 = vsel %vm102, %v101, %v98
  %v107 = vmul.f32 %v106, %v82
  %v108 = vmul.f32 %v105, %v83
  %v109 = vmul.f32 %v104, %v84
  %v110 = vmul.f32 %v103, %v85
  %v111 = vrot.slane %v17, 1
  %v112 = vrot.slane %v18, 1
  %v113 = vrot.slane %v19, 1
  %v114 = vrot.slane %v20, 1
  %vm115 = vcmp.lt.s32.totalorder %v22, 7
  %v116 = vsel %vm115, %v113, %v114
  %v117 = vsel %vm115, %v112, %v113
  %v118 = vsel %vm115, %v111, %v112
  %v119 = vsel %vm115, %v114, %v111
  %v120 = vmul.f32 %v118, %v94
  %v121 = vmul.f32 %v117, %v95
  %v122 = vmul.f32 %v116, %v96
  %v123 = vmul.f32 %v119, %v97
  %v124 = vld [vmem:[%s1] sm:$0xff]
  %v125 = vld [vmem:[%s1 + $0x8] sm:$0xff]
  %v126 = vld [vmem:[%s1 + $0x10] sm:$0xff]
  %v127 = vld [vmem:[%s1 + $0x18] sm:$0xff]
  %v128 = vld [vmem:[%s1 + $0x20] sm:$0xff]
  %v129 = vld [vmem:[%s1 + $0x28] sm:$0xff]
  %v130 = vld [vmem:[%s1 + $0x30] sm:$0xff]
  %v131 = vld [vmem:[%s1 + $0x38] sm:$0xff]
  %v132 = vld [vmem:[%s1 + $0x40] sm:$0xff]
  %v133 = vld [vmem:[%s1 + $0x48] sm:$0xff]
  %v134 = vld [vmem:[%s1 + $0x50] sm:$0xff]
  %v135 = vld [vmem:[%s1 + $0x58] sm:$0xff]
  %v136 = vld [vmem:[%s1 + $0x60] sm:$0xff]
  %v137 = vld [vmem:[%s1 + $0x68] sm:$0xff]
  %v138 = vld [vmem:[%s1 + $0x70] sm:$0xff]
  %v139 = vld [vmem:[%s1 + $0x78] sm:$0xff]
  %v140 = vld [vmem:[%s1 + $0x80] sm:$0xff]
  %v141 = vld [vmem:[%s1 + $0x88] sm:$0xff]
  %v142 = vld [vmem:[%s1 + $0x90] sm:$0xff]
  %v143 = vld [vmem:[%s1 + $0x98] sm:$0xff]
  %v144 = vld [vmem:[%s1 + $0xa0] sm:$0xff]
  %v145 = vld [vmem:[%s1 + $0xa8] sm:$0xff]
  %v146 = vld [vmem:[%s1 + $0xb0] sm:$0xff]
  %v147 = vld [vmem:[%s1 + $0xb8] sm:$0xff]
  %v148 = vld [vmem:[%s1 + $0xc0] sm:$0xff]
  %v149 = vld [vmem:[%s1 + $0xc8] sm:$0xff]
  %v150 = vld [vmem:[%s1 + $0xd0] sm:$0xff]
  %v151 = vld [vmem:[%s1 + $0xd8] sm:$0xff]
  %v152 = vld [vmem:[%s1 + $0xe0] sm:$0xff]
  %v153 = vld [vmem:[%s1 + $0xe8] sm:$0xff]
  %v154 = vld [vmem:[%s1 + $0xf0] sm:$0xff]
  %v155 = vld [vmem:[%s1 + $0xf8] sm:$0xff]
  %v156 = vld [vmem:[%s1 + $0x100] sm:$0xff]
  %v157 = vld [vmem:[%s1 + $0x108] sm:$0xff]
  %v158 = vld [vmem:[%s1 + $0x110] sm:$0xff]
  %v159 = vld [vmem:[%s1 + $0x118] sm:$0xff]
  %v160 = vld [vmem:[%s1 + $0x120] sm:$0xff]
  %v161 = vld [vmem:[%s1 + $0x128] sm:$0xff]
  %v162 = vld [vmem:[%s1 + $0x130] sm:$0xff]
  %v163 = vld [vmem:[%s1 + $0x138] sm:$0xff]
  %v164 = vld [vmem:[%s1 + $0x140] sm:$0xff]
  %v165 = vld [vmem:[%s1 + $0x148] sm:$0xff]
  %v166 = vld [vmem:[%s1 + $0x150] sm:$0xff]
  %v167 = vld [vmem:[%s1 + $0x158] sm:$0xff]
  %v168 = vld [vmem:[%s1 + $0x160] sm:$0xff]
  %v169 = vld [vmem:[%s1 + $0x168] sm:$0xff]
  %v170 = vld [vmem:[%s1 + $0x170] sm:$0xff]
  %v171 = vld [vmem:[%s1 + $0x178] sm:$0xff]
  %172 = vmatprep.subr.mxu0 0.0
  %173 = vmatpush1.msra.mxu0 %v124
  %174 = vmatprep.subr.mxu0 0.0
  %175 = vmatpush1.msra.mxu0 %v125
  %176 = vmatprep.subr.mxu0 0.0
  %177 = vmatpush1.msra.mxu0 %v126
  %178 = vmatprep.subr.mxu0 0.0
  %179 = vmatpush1.msra.mxu0 %v127
  %180 = vmatprep.subr.mxu0 0.0
  %181 = vmatpush1.msra.mxu0 %v128
  %182 = vmatprep.subr.mxu0 0.0
  %183 = vmatpush1.msra.mxu0 %v129
  %184 = vmatprep.subr.mxu0 0.0
  %185 = vmatpush1.msra.mxu0 %v130
  %186 = vmatprep.subr.mxu0 0.0
  %187 = vmatpush1.msra.mxu0 %v131
  %188 = vmatprep.subr.mxu0 0.0
  %189 = vmatpush1.msra.mxu0 %v132
  %190 = vmatprep.subr.mxu0 0.0
  %191 = vmatpush1.msra.mxu0 %v133
  %192 = vmatprep.subr.mxu0 0.0
  %193 = vmatpush1.msra.mxu0 %v134
  %194 = vmatprep.subr.mxu0 0.0
  %195 = vmatpush1.msra.mxu0 %v135
  %196 = vmatprep.subr.mxu0 0.0
  %197 = vmatpush1.msra.mxu0 %v136
  %198 = vmatprep.subr.mxu0 0.0
  %199 = vmatpush1.msra.mxu0 %v137
  %200 = vmatprep.subr.mxu0 0.0
  %201 = vmatpush1.msra.mxu0 %v138
  %202 = vmatprep.subr.mxu0 0.0
  %203 = vmatpush1.msra.mxu0 %v139
  %204 = vmatprep.subr.mxu0 0.0
  %205 = vmatpush1.msra.mxu0 %v140
  %206 = vmatprep.subr.mxu0 0.0
  %207 = vmatpush1.msra.mxu0 %v141
  %208 = vmatprep.subr.mxu0 0.0
  %209 = vmatpush1.msra.mxu0 %v142
  %210 = vmatprep.subr.mxu0 0.0
  %211 = vmatpush1.msra.mxu0 %v143
  %212 = vmatprep.subr.mxu0 0.0
  %213 = vmatpush1.msra.mxu0 %v144
  %214 = vmatprep.subr.mxu0 0.0
  %215 = vmatpush1.msra.mxu0 %v145
  %216 = vmatprep.subr.mxu0 0.0
  %217 = vmatpush1.msra.mxu0 %v146
  %218 = vmatprep.subr.mxu0 0.0
  %219 = vmatpush1.msra.mxu0 %v147
  %220 = vmatprep.subr.mxu0 0.0
  %221 = vmatpush1.msra.mxu0 %v148
  %222 = vmatprep.subr.mxu0 0.0
  %223 = vmatpush1.msra.mxu0 %v149
  %224 = vmatprep.subr.mxu0 0.0
  %225 = vmatpush1.msra.mxu0 %v150
  %226 = vmatprep.subr.mxu0 0.0
  %227 = vmatpush1.msra.mxu0 %v151
  %228 = vmatprep.subr.mxu0 0.0
  %229 = vmatpush1.msra.mxu0 %v152
  %230 = vmatprep.subr.mxu0 0.0
  %231 = vmatpush1.msra.mxu0 %v153
  %232 = vmatprep.subr.mxu0 0.0
  %233 = vmatpush1.msra.mxu0 %v154
  %234 = vmatprep.subr.mxu0 0.0
  %235 = vmatpush1.msra.mxu0 %v155
  %236 = vmatprep.mubr.f32.mxu0 %v17
  %237 = vmatmul.mubr.f32.gmra.mrb[0].mxu0 %v107
  %v238 = vpop.f32.mrb[0].mxu0
  %v239 = vadd.f32 0.0, %v238
  %v240 = vpop.f32.mrb[0].mxu0
  %241 = vmatprep.mubr.f32.mxu0 %v18
  %242 = vmatmul.mubr.f32.gmra.mrb[0].mxu0 %v108
  %v243 = vpop.f32.mrb[0].mxu0
  %v244 = vadd.f32 0.0, %v243
  %v245 = vpop.f32.mrb[0].mxu0
  %246 = vmatprep.mubr.f32.mxu0 %v19
  %247 = vmatmul.mubr.f32.gmra.mrb[0].mxu0 %v109
  %v248 = vpop.f32.mrb[0].mxu0
  %v249 = vadd.f32 0.0, %v248
  %v250 = vpop.f32.mrb[0].mxu0
  %251 = vmatprep.mubr.f32.mxu0 %v20
  %252 = vmatmul.mubr.f32.gmra.mrb[0].mxu0 %v110
  %v253 = vpop.f32.mrb[0].mxu0
  %v254 = vadd.f32 0.0, %v253
  %v255 = vpop.f32.mrb[0].mxu0
  %256 = vdwg.mxu0
  %257 = vmatprep.subr.mxu0 0.0
  %258 = vmatpush1.msra.mxu0 %v156
  %259 = vmatprep.subr.mxu0 0.0
  %260 = vmatpush1.msra.mxu0 %v157
  %261 = vmatprep.subr.mxu0 0.0
  %262 = vmatpush1.msra.mxu0 %v158
  %263 = vmatprep.subr.mxu0 0.0
  %264 = vmatpush1.msra.mxu0 %v159
  %265 = vmatprep.subr.mxu0 0.0
  %266 = vmatpush1.msra.mxu0 %v160
  %267 = vmatprep.subr.mxu0 0.0
  %268 = vmatpush1.msra.mxu0 %v161
  %269 = vmatprep.subr.mxu0 0.0
  %270 = vmatpush1.msra.mxu0 %v162
  %271 = vmatprep.subr.mxu0 0.0
  %272 = vmatpush1.msra.mxu0 %v163
  %273 = vmatprep.subr.mxu0 0.0
  %274 = vmatpush1.msra.mxu0 %v164
  %275 = vmatprep.subr.mxu0 0.0
  %276 = vmatpush1.msra.mxu0 %v165
  %277 = vmatprep.subr.mxu0 0.0
  %278 = vmatpush1.msra.mxu0 %v166
  %279 = vmatprep.subr.mxu0 0.0
  %280 = vmatpush1.msra.mxu0 %v167
  %281 = vmatprep.subr.mxu0 0.0
  %282 = vmatpush1.msra.mxu0 %v168
  %283 = vmatprep.subr.mxu0 0.0
  %284 = vmatpush1.msra.mxu0 %v169
  %285 = vmatprep.subr.mxu0 0.0
  %286 = vmatpush1.msra.mxu0 %v170
  %287 = vmatprep.subr.mxu0 0.0
  %288 = vmatpush1.msra.mxu0 %v171
  %289 = vmatprep.subr.mxu0 0.0
  %290 = vmatpush1.msra.mxu0 0.0
  %291 = vmatprep.subr.mxu0 0.0
  %292 = vmatpush1.msra.mxu0 0.0
  %293 = vmatprep.subr.mxu0 0.0
  %294 = vmatpush1.msra.mxu0 0.0
  %295 = vmatprep.subr.mxu0 0.0
  %296 = vmatpush1.msra.mxu0 0.0
  %297 = vmatprep.subr.mxu0 0.0
  %298 = vmatpush1.msra.mxu0 0.0
  %299 = vmatprep.subr.mxu0 0.0
  %300 = vmatpush1.msra.mxu0 0.0
  %301 = vmatprep.subr.mxu0 0.0
  %302 = vmatpush1.msra.mxu0 0.0
  %303 = vmatprep.subr.mxu0 0.0
  %304 = vmatpush1.msra.mxu0 0.0
  %305 = vmatprep.subr.mxu0 0.0
  %306 = vmatpush1.msra.mxu0 0.0
  %307 = vmatprep.subr.mxu0 0.0
  %308 = vmatpush1.msra.mxu0 0.0
  %309 = vmatprep.subr.mxu0 0.0
  %310 = vmatpush1.msra.mxu0 0.0
  %311 = vmatprep.subr.mxu0 0.0
  %312 = vmatpush1.msra.mxu0 0.0
  %313 = vmatprep.subr.mxu0 0.0
  %314 = vmatpush1.msra.mxu0 0.0
  %315 = vmatprep.subr.mxu0 0.0
  %316 = vmatpush1.msra.mxu0 0.0
  %317 = vmatprep.subr.mxu0 0.0
  %318 = vmatpush1.msra.mxu0 0.0
  %319 = vmatprep.subr.mxu0 0.0
  %320 = vmatpush1.msra.mxu0 0.0
  %321 = vmatprep.mubr.f32.mxu0 0.0
  %322 = vmatmul.mubr.f32.gmra.mrb[0].mxu0 %v120
  %v323 = vpop.f32.mrb[0].mxu0
  %v324 = vadd.f32 %v239, %v323
  %v325 = vpop.f32.mrb[0].mxu0
  %326 = vmatprep.mubr.f32.mxu0 0.0
  %327 = vmatmul.mubr.f32.gmra.mrb[0].mxu0 %v121
  %v328 = vpop.f32.mrb[0].mxu0
  %v329 = vadd.f32 %v244, %v328
  %v330 = vpop.f32.mrb[0].mxu0
  %331 = vmatprep.mubr.f32.mxu0 0.0
  %332 = vmatmul.mubr.f32.gmra.mrb[0].mxu0 %v122
  %v333 = vpop.f32.mrb[0].mxu0
  %v334 = vadd.f32 %v249, %v333
  %v335 = vpop.f32.mrb[0].mxu0
  %336 = vmatprep.mubr.f32.mxu0 0.0
  %337 = vmatmul.mubr.f32.gmra.mrb[0].mxu0 %v123
  %v338 = vpop.f32.mrb[0].mxu0
  %v339 = vadd.f32 %v254, %v338
  %v340 = vpop.f32.mrb[0].mxu0
  %341 = vdwg.mxu0
  %v342 = vld [vmem:[%s3] sm:$0x1]
  %v343 = vld [vmem:[%s3 + $0x1] sm:$0x1]
  %v344 = vadd.f32 %v324, %v329
  %v345 = vadd.f32 %v344, %v334
  %v346 = vadd.f32 %v345, %v339
  %v347 = vrot.slane %v346, 4
  %v348 = vadd.f32 %v346, %v347
  %v349 = vrot.slane %v348, 2
  %v350 = vadd.f32 %v348, %v349
  %v351 = vrot.slane %v350, 1
  %v352 = vadd.f32 %v350, %v351
  %v353 = vmul.f32 %v324, %v324
  %v354 = vmul.f32 %v329, %v329
  %v355 = vmul.f32 %v334, %v334
  %v356 = vmul.f32 %v339, %v339
  %v357 = vadd.f32 %v353, %v354
  %v358 = vadd.f32 %v357, %v355
  %v359 = vadd.f32 %v358, %v356
  %v360 = vrot.slane %v359, 4
  %v361 = vadd.f32 %v359, %v360
  %v362 = vrot.slane %v361, 2
  %v363 = vadd.f32 %v361, %v362
  %v364 = vrot.slane %v363, 1
  %v365 = vadd.f32 %v363, %v364
  %vm366 = vcmask 1040384
  %v367 = vsel %vm366, %v352, %v365
  %368 = vrot.lane.b32.xlu0 %v367, 8
  %v369 = vpop.permute.xlu0 %368
  %v370 = vadd.f32 %v367, %v369
  %371 = vrot.lane.b32.xlu0 %v370, 16
  %v372 = vpop.permute.xlu0 %371
  %v373 = vadd.f32 %v370, %v372
  %374 = vrot.lane.b32.xlu0 %v373, 32
  %v375 = vpop.permute.xlu0 %374
  %v376 = vadd.f32 %v373, %v375
  %377 = vrot.lane.b32.xlu0 %v376, 64
  %v378 = vpop.permute.xlu0 %377
  %v379 = vadd.f32 %v376, %v378
  %v380 = vmul.f32 %v379, 0.001953125
  %v381 = vmul.f32 %v380, %v380
  %v383 = vrot.slane %v381, 7
  %v385 = vsub.f32 %v380, %v383
  %v386 = vadd.f32 %v385, 1e-05
  %v387 = vrsqrt.pop %v386
  %v389 = vrot.slane %v387, 1
  %v391 = vmul.f32 %v342, %v389
  %v392 = vmul.f32 %v380, %v391
  %v393 = vsub.f32 %v343, %v392
  %v394 = vlaneseq
  %v395 = vshrl.u32 %v394, 7
  %v396 = vsub.s32 0, %v395
  %v397 = vrot.slane %v391, %v396
  %v398 = vmul.f32 %v324, %v397
  %v399 = vmul.f32 %v329, %v397
  %v400 = vmul.f32 %v334, %v397
  %v401 = vmul.f32 %v339, %v397
  %v402 = vlaneseq
  %v403 = vshrl.u32 %v402, 7
  %v404 = vsub.s32 0, %v403
  %v405 = vrot.slane %v393, %v404
  %v406 = vadd.f32 %v398, %v405
  %v407 = vadd.f32 %v399, %v405
  %v408 = vadd.f32 %v400, %v405
  %v409 = vadd.f32 %v401, %v405
  %v410 = vmax.f32 %v406, 0.0
  %v411 = vmax.f32 %v407, 0.0
  %v412 = vmax.f32 %v408, 0.0
  %v413 = vmax.f32 %v409, 0.0
  %v414 = vrot.slane %v410, 7
  %v415 = vrot.slane %v411, 7
  %v416 = vrot.slane %v412, 7
  %v417 = vrot.slane %v413, 7
  %v418 = vsel %vm102, %v416, %v417
  %v419 = vsel %vm102, %v415, %v416
  %v420 = vsel %vm102, %v414, %v415
  %v421 = vsel %vm102, %v417, %v414
  %v422 = vmul.f32 %v421, %v82
  %v423 = vmul.f32 %v420, %v83
  %v424 = vmul.f32 %v419, %v84
  %v425 = vmul.f32 %v418, %v85
  %v426 = vrot.slane %v410, 1
  %v427 = vrot.slane %v411, 1
  %v428 = vrot.slane %v412, 1
  %v429 = vrot.slane %v413, 1
  %v430 = vsel %vm115, %v428, %v429
  %v431 = vsel %vm115, %v427, %v428
  %v432 = vsel %vm115, %v426, %v427
  %v433 = vsel %vm115, %v429, %v426
  %v434 = vmul.f32 %v432, %v94
  %v435 = vmul.f32 %v431, %v95
  %v436 = vmul.f32 %v430, %v96
  %v437 = vmul.f32 %v433, %v97
  %v438 = vld [vmem:[%s2] sm:$0xff]
  %v439 = vld [vmem:[%s2 + $0x8] sm:$0xff]
  %v440 = vld [vmem:[%s2 + $0x10] sm:$0xff]
  %v441 = vld [vmem:[%s2 + $0x18] sm:$0xff]
  %v442 = vld [vmem:[%s2 + $0x20] sm:$0xff]
  %v443 = vld [vmem:[%s2 + $0x28] sm:$0xff]
  %v444 = vld [vmem:[%s2 + $0x30] sm:$0xff]
  %v445 = vld [vmem:[%s2 + $0x38] sm:$0xff]
  %v446 = vld [vmem:[%s2 + $0x40] sm:$0xff]
  %v447 = vld [vmem:[%s2 + $0x48] sm:$0xff]
  %v448 = vld [vmem:[%s2 + $0x50] sm:$0xff]
  %v449 = vld [vmem:[%s2 + $0x58] sm:$0xff]
  %v450 = vld [vmem:[%s2 + $0x60] sm:$0xff]
  %v451 = vld [vmem:[%s2 + $0x68] sm:$0xff]
  %v452 = vld [vmem:[%s2 + $0x70] sm:$0xff]
  %v453 = vld [vmem:[%s2 + $0x78] sm:$0xff]
  %v454 = vld [vmem:[%s2 + $0x80] sm:$0xff]
  %v455 = vld [vmem:[%s2 + $0x88] sm:$0xff]
  %v456 = vld [vmem:[%s2 + $0x90] sm:$0xff]
  %v457 = vld [vmem:[%s2 + $0x98] sm:$0xff]
  %v458 = vld [vmem:[%s2 + $0xa0] sm:$0xff]
  %v459 = vld [vmem:[%s2 + $0xa8] sm:$0xff]
  %v460 = vld [vmem:[%s2 + $0xb0] sm:$0xff]
  %v461 = vld [vmem:[%s2 + $0xb8] sm:$0xff]
  %v462 = vld [vmem:[%s2 + $0xc0] sm:$0xff]
  %v463 = vld [vmem:[%s2 + $0xc8] sm:$0xff]
  %v464 = vld [vmem:[%s2 + $0xd0] sm:$0xff]
  %v465 = vld [vmem:[%s2 + $0xd8] sm:$0xff]
  %v466 = vld [vmem:[%s2 + $0xe0] sm:$0xff]
  %v467 = vld [vmem:[%s2 + $0xe8] sm:$0xff]
  %v468 = vld [vmem:[%s2 + $0xf0] sm:$0xff]
  %v469 = vld [vmem:[%s2 + $0xf8] sm:$0xff]
  %v470 = vld [vmem:[%s2 + $0x100] sm:$0xff]
  %v471 = vld [vmem:[%s2 + $0x108] sm:$0xff]
  %v472 = vld [vmem:[%s2 + $0x110] sm:$0xff]
  %v473 = vld [vmem:[%s2 + $0x118] sm:$0xff]
  %v474 = vld [vmem:[%s2 + $0x120] sm:$0xff]
  %v475 = vld [vmem:[%s2 + $0x128] sm:$0xff]
  %v476 = vld [vmem:[%s2 + $0x130] sm:$0xff]
  %v477 = vld [vmem:[%s2 + $0x138] sm:$0xff]
  %v478 = vld [vmem:[%s2 + $0x140] sm:$0xff]
  %v479 = vld [vmem:[%s2 + $0x148] sm:$0xff]
  %v480 = vld [vmem:[%s2 + $0x150] sm:$0xff]
  %v481 = vld [vmem:[%s2 + $0x158] sm:$0xff]
  %v482 = vld [vmem:[%s2 + $0x160] sm:$0xff]
  %v483 = vld [vmem:[%s2 + $0x168] sm:$0xff]
  %v484 = vld [vmem:[%s2 + $0x170] sm:$0xff]
  %v485 = vld [vmem:[%s2 + $0x178] sm:$0xff]
  %486 = vmatprep.subr.mxu0 0.0
  %487 = vmatpush1.msra.mxu0 %v438
  %488 = vmatprep.subr.mxu0 0.0
  %489 = vmatpush1.msra.mxu0 %v439
  %490 = vmatprep.subr.mxu0 0.0
  %491 = vmatpush1.msra.mxu0 %v440
  %492 = vmatprep.subr.mxu0 0.0
  %493 = vmatpush1.msra.mxu0 %v441
  %494 = vmatprep.subr.mxu0 0.0
  %495 = vmatpush1.msra.mxu0 %v442
  %496 = vmatprep.subr.mxu0 0.0
  %497 = vmatpush1.msra.mxu0 %v443
  %498 = vmatprep.subr.mxu0 0.0
  %499 = vmatpush1.msra.mxu0 %v444
  %500 = vmatprep.subr.mxu0 0.0
  %501 = vmatpush1.msra.mxu0 %v445
  %502 = vmatprep.subr.mxu0 0.0
  %503 = vmatpush1.msra.mxu0 %v446
  %504 = vmatprep.subr.mxu0 0.0
  %505 = vmatpush1.msra.mxu0 %v447
  %506 = vmatprep.subr.mxu0 0.0
  %507 = vmatpush1.msra.mxu0 %v448
  %508 = vmatprep.subr.mxu0 0.0
  %509 = vmatpush1.msra.mxu0 %v449
  %510 = vmatprep.subr.mxu0 0.0
  %511 = vmatpush1.msra.mxu0 %v450
  %512 = vmatprep.subr.mxu0 0.0
  %513 = vmatpush1.msra.mxu0 %v451
  %514 = vmatprep.subr.mxu0 0.0
  %515 = vmatpush1.msra.mxu0 %v452
  %516 = vmatprep.subr.mxu0 0.0
  %517 = vmatpush1.msra.mxu0 %v453
  %518 = vmatprep.subr.mxu0 0.0
  %519 = vmatpush1.msra.mxu0 %v454
  %520 = vmatprep.subr.mxu0 0.0
  %521 = vmatpush1.msra.mxu0 %v455
  %522 = vmatprep.subr.mxu0 0.0
  %523 = vmatpush1.msra.mxu0 %v456
  %524 = vmatprep.subr.mxu0 0.0
  %525 = vmatpush1.msra.mxu0 %v457
  %526 = vmatprep.subr.mxu0 0.0
  %527 = vmatpush1.msra.mxu0 %v458
  %528 = vmatprep.subr.mxu0 0.0
  %529 = vmatpush1.msra.mxu0 %v459
  %530 = vmatprep.subr.mxu0 0.0
  %531 = vmatpush1.msra.mxu0 %v460
  %532 = vmatprep.subr.mxu0 0.0
  %533 = vmatpush1.msra.mxu0 %v461
  %534 = vmatprep.subr.mxu0 0.0
  %535 = vmatpush1.msra.mxu0 %v462
  %536 = vmatprep.subr.mxu0 0.0
  %537 = vmatpush1.msra.mxu0 %v463
  %538 = vmatprep.subr.mxu0 0.0
  %539 = vmatpush1.msra.mxu0 %v464
  %540 = vmatprep.subr.mxu0 0.0
  %541 = vmatpush1.msra.mxu0 %v465
  %542 = vmatprep.subr.mxu0 0.0
  %543 = vmatpush1.msra.mxu0 %v466
  %544 = vmatprep.subr.mxu0 0.0
  %545 = vmatpush1.msra.mxu0 %v467
  %546 = vmatprep.subr.mxu0 0.0
  %547 = vmatpush1.msra.mxu0 %v468
  %548 = vmatprep.subr.mxu0 0.0
  %549 = vmatpush1.msra.mxu0 %v469
  %550 = vmatprep.mubr.f32.mxu0 %v410
  %551 = vmatmul.mubr.f32.gmra.mrb[0].mxu0 %v422
  %v552 = vpop.f32.mrb[0].mxu0
  %v553 = vadd.f32 0.0, %v552
  %v554 = vpop.f32.mrb[0].mxu0
  %555 = vmatprep.mubr.f32.mxu0 %v411
  %556 = vmatmul.mubr.f32.gmra.mrb[0].mxu0 %v423
  %v557 = vpop.f32.mrb[0].mxu0
  %v558 = vadd.f32 0.0, %v557
  %v559 = vpop.f32.mrb[0].mxu0
  %560 = vmatprep.mubr.f32.mxu0 %v412
  %561 = vmatmul.mubr.f32.gmra.mrb[0].mxu0 %v424
  %v562 = vpop.f32.mrb[0].mxu0
  %v563 = vadd.f32 0.0, %v562
  %v564 = vpop.f32.mrb[0].mxu0
  %565 = vmatprep.mubr.f32.mxu0 %v413
  %566 = vmatmul.mubr.f32.gmra.mrb[0].mxu0 %v425
  %v567 = vpop.f32.mrb[0].mxu0
  %v568 = vadd.f32 0.0, %v567
  %v569 = vpop.f32.mrb[0].mxu0
  %570 = vdwg.mxu0
  %571 = vmatprep.subr.mxu0 0.0
  %572 = vmatpush1.msra.mxu0 %v470
  %573 = vmatprep.subr.mxu0 0.0
  %574 = vmatpush1.msra.mxu0 %v471
  %575 = vmatprep.subr.mxu0 0.0
  %576 = vmatpush1.msra.mxu0 %v472
  %577 = vmatprep.subr.mxu0 0.0
  %578 = vmatpush1.msra.mxu0 %v473
  %579 = vmatprep.subr.mxu0 0.0
  %580 = vmatpush1.msra.mxu0 %v474
  %581 = vmatprep.subr.mxu0 0.0
  %582 = vmatpush1.msra.mxu0 %v475
  %583 = vmatprep.subr.mxu0 0.0
  %584 = vmatpush1.msra.mxu0 %v476
  %585 = vmatprep.subr.mxu0 0.0
  %586 = vmatpush1.msra.mxu0 %v477
  %587 = vmatprep.subr.mxu0 0.0
  %588 = vmatpush1.msra.mxu0 %v478
  %589 = vmatprep.subr.mxu0 0.0
  %590 = vmatpush1.msra.mxu0 %v479
  %591 = vmatprep.subr.mxu0 0.0
  %592 = vmatpush1.msra.mxu0 %v480
  %593 = vmatprep.subr.mxu0 0.0
  %594 = vmatpush1.msra.mxu0 %v481
  %595 = vmatprep.subr.mxu0 0.0
  %596 = vmatpush1.msra.mxu0 %v482
  %597 = vmatprep.subr.mxu0 0.0
  %598 = vmatpush1.msra.mxu0 %v483
  %599 = vmatprep.subr.mxu0 0.0
  %600 = vmatpush1.msra.mxu0 %v484
  %601 = vmatprep.subr.mxu0 0.0
  %602 = vmatpush1.msra.mxu0 %v485
  %603 = vmatprep.subr.mxu0 0.0
  %604 = vmatpush1.msra.mxu0 0.0
  %605 = vmatprep.subr.mxu0 0.0
  %606 = vmatpush1.msra.mxu0 0.0
  %607 = vmatprep.subr.mxu0 0.0
  %608 = vmatpush1.msra.mxu0 0.0
  %609 = vmatprep.subr.mxu0 0.0
  %610 = vmatpush1.msra.mxu0 0.0
  %611 = vmatprep.subr.mxu0 0.0
  %612 = vmatpush1.msra.mxu0 0.0
  %613 = vmatprep.subr.mxu0 0.0
  %614 = vmatpush1.msra.mxu0 0.0
  %615 = vmatprep.subr.mxu0 0.0
  %616 = vmatpush1.msra.mxu0 0.0
  %617 = vmatprep.subr.mxu0 0.0
  %618 = vmatpush1.msra.mxu0 0.0
  %619 = vmatprep.subr.mxu0 0.0
  %620 = vmatpush1.msra.mxu0 0.0
  %621 = vmatprep.subr.mxu0 0.0
  %622 = vmatpush1.msra.mxu0 0.0
  %623 = vmatprep.subr.mxu0 0.0
  %624 = vmatpush1.msra.mxu0 0.0
  %625 = vmatprep.subr.mxu0 0.0
  %626 = vmatpush1.msra.mxu0 0.0
  %627 = vmatprep.subr.mxu0 0.0
  %628 = vmatpush1.msra.mxu0 0.0
  %629 = vmatprep.subr.mxu0 0.0
  %630 = vmatpush1.msra.mxu0 0.0
  %631 = vmatprep.subr.mxu0 0.0
  %632 = vmatpush1.msra.mxu0 0.0
  %633 = vmatprep.subr.mxu0 0.0
  %634 = vmatpush1.msra.mxu0 0.0
  %635 = vmatprep.mubr.f32.mxu0 0.0
  %636 = vmatmul.mubr.f32.gmra.mrb[0].mxu0 %v434
  %v637 = vpop.f32.mrb[0].mxu0
  %v638 = vadd.f32 %v553, %v637
  %v639 = vpop.f32.mrb[0].mxu0
  %640 = vmatprep.mubr.f32.mxu0 0.0
  %641 = vmatmul.mubr.f32.gmra.mrb[0].mxu0 %v435
  %v642 = vpop.f32.mrb[0].mxu0
  %v643 = vadd.f32 %v558, %v642
  %v644 = vpop.f32.mrb[0].mxu0
  %645 = vmatprep.mubr.f32.mxu0 0.0
  %646 = vmatmul.mubr.f32.gmra.mrb[0].mxu0 %v436
  %v647 = vpop.f32.mrb[0].mxu0
  %v648 = vadd.f32 %v563, %v647
  %v649 = vpop.f32.mrb[0].mxu0
  %650 = vmatprep.mubr.f32.mxu0 0.0
  %651 = vmatmul.mubr.f32.gmra.mrb[0].mxu0 %v437
  %v652 = vpop.f32.mrb[0].mxu0
  %v653 = vadd.f32 %v568, %v652
  %v654 = vpop.f32.mrb[0].mxu0
  %655 = vdwg.mxu0
  %v656 = vld [vmem:[%s3 + $0x2] sm:$0x1]
  %v657 = vld [vmem:[%s3 + $0x3] sm:$0x1]
  %v658 = vadd.f32 %v638, %v643
  %v659 = vadd.f32 %v658, %v648
  %v660 = vadd.f32 %v659, %v653
  %v661 = vrot.slane %v660, 4
  %v662 = vadd.f32 %v660, %v661
  %v663 = vrot.slane %v662, 2
  %v664 = vadd.f32 %v662, %v663
  %v665 = vrot.slane %v664, 1
  %v666 = vadd.f32 %v664, %v665
  %v667 = vmul.f32 %v638, %v638
  %v668 = vmul.f32 %v643, %v643
  %v669 = vmul.f32 %v648, %v648
  %v670 = vmul.f32 %v653, %v653
  %v671 = vadd.f32 %v667, %v668
  %v672 = vadd.f32 %v671, %v669
  %v673 = vadd.f32 %v672, %v670
  %v674 = vrot.slane %v673, 4
  %v675 = vadd.f32 %v673, %v674
  %v676 = vrot.slane %v675, 2
  %v677 = vadd.f32 %v675, %v676
  %v678 = vrot.slane %v677, 1
  %v679 = vadd.f32 %v677, %v678
  %v680 = vsel %vm366, %v666, %v679
  %681 = vrot.lane.b32.xlu0 %v680, 8
  %v682 = vpop.permute.xlu0 %681
  %v683 = vadd.f32 %v680, %v682
  %684 = vrot.lane.b32.xlu0 %v683, 16
  %v685 = vpop.permute.xlu0 %684
  %v686 = vadd.f32 %v683, %v685
  %687 = vrot.lane.b32.xlu0 %v686, 32
  %v688 = vpop.permute.xlu0 %687
  %v689 = vadd.f32 %v686, %v688
  %690 = vrot.lane.b32.xlu0 %v689, 64
  %v691 = vpop.permute.xlu0 %690
  %v692 = vadd.f32 %v689, %v691
  %v693 = vmul.f32 %v692, 0.001953125
  %v694 = vmul.f32 %v693, %v693
  %v696 = vrot.slane %v694, 7
  %v698 = vsub.f32 %v693, %v696
  %v699 = vadd.f32 %v698, 1e-05
  %v700 = vrsqrt.pop %v699
  %v702 = vrot.slane %v700, 1
  %v704 = vmul.f32 %v656, %v702
  %v705 = vmul.f32 %v693, %v704
  %v706 = vsub.f32 %v657, %v705
  %v707 = vlaneseq
  %v708 = vshrl.u32 %v707, 7
  %v709 = vsub.s32 0, %v708
  %v710 = vrot.slane %v704, %v709
  %v711 = vmul.f32 %v638, %v710
  %v712 = vmul.f32 %v643, %v710
  %v713 = vmul.f32 %v648, %v710
  %v714 = vmul.f32 %v653, %v710
  %v715 = vlaneseq
  %v716 = vshrl.u32 %v715, 7
  %v717 = vsub.s32 0, %v716
  %v718 = vrot.slane %v706, %v717
  %v719 = vadd.f32 %v711, %v718
  %v720 = vadd.f32 %v712, %v718
  %v721 = vadd.f32 %v713, %v718
  %v722 = vadd.f32 %v714, %v718
  %v723 = vadd.f32 %v719, %v17
  %v724 = vadd.f32 %v720, %v18
  %v725 = vadd.f32 %v721, %v19
  %v726 = vadd.f32 %v722, %v20
  %v727 = vmax.f32 %v723, 0.0
  %v728 = vmax.f32 %v724, 0.0
  %v729 = vmax.f32 %v725, 0.0
  %v730 = vmax.f32 %v726, 0.0
  %731 = vst [vmem:[%s4] sm:$0xff] %v727
  %732 = vst [vmem:[%s4 + $0x8] sm:$0xff] %v728
  %733 = vst [vmem:[%s4 + $0x10] sm:$0xff] %v729
  %734 = vst [vmem:[%s4 + $0x18] sm:$0xff] %v730
  // Predicated region
  $region18: #{basic_block_forward.1} parent=0 // pred_check
    _
  $region19: #{basic_block_forward.1} parent=0 // pred_check_branch
    %736 = sbr.rel (0) target = $region21
  $region20: #{basic_block_forward.1} parent=0 // pred_region
    _
  $region21: #{basic_block_forward.1} parent=0 // pred_fallthru
    _
  // Predicated region
  $region22: #{basic_block_forward.1} parent=0 // pred_check
    _
  $region23: #{basic_block_forward.1} parent=0 // pred_check_branch
    %738 = sbr.rel (0) target = $region25
  $region24: #{basic_block_forward.1} parent=0 // pred_region
    _
  $region25: #{basic_block_forward.1} parent=0 // pred_fallthru
    _

</llo_original>
